<compile_context>
chip_gen: v7x
topology: tpu7x:2x2x1
jax: 0.10.0
libtpu: 0.0.40
codegen_flags: <defaults>
</compile_context>

<pallas_src>
import jax
import jax.numpy as jnp
from jax.experimental import pallas as pl
from jax.experimental.pallas import tpu as pltpu

DIM_INPUT = 12
DIM_OUTPUT = 1
DIM_HIDDEN = 4
N_HIDDEN_LAYERS = 3
LEAKY_COEF = 0.15

# (out_features, in_features) per layer, in forward order.
LAYER_DIMS = (
    [(DIM_HIDDEN, DIM_INPUT)]
    + [(DIM_HIDDEN, DIM_HIDDEN)] * N_HIDDEN_LAYERS
    + [(DIM_OUTPUT, DIM_HIDDEN)]
)
N_LAYERS = len(LAYER_DIMS)

# Packed-parameter slab: one (8, 128) tile per layer; [W | b] stored row-major
# with W in cols [0, d_in) and b in col d_in.
PACK_SUB = 8
PACK_LANE = 128


def mlp_kernel(params_ref, x_ref, o_ref):
    """Fused MLP forward on one batch tile.

    params_ref: (N_LAYERS, 8, 128) VMEM-resident packed weights/biases.
    x_ref:      (DIM_INPUT, TILE_B)  feature-major activations.
    o_ref:      (DIM_OUTPUT, TILE_B) feature-major output.
    """
    h = x_ref[...].astype(jnp.float32)                    # (12, TB)
    for l, (d_out, d_in) in enumerate(LAYER_DIMS):
        layer = params_ref[l]                              # (8, 128), static idx
        w = layer[:d_out, :d_in]                           # (d_out, d_in)
        b = layer[:d_out, d_in:d_in + 1]                   # (d_out, 1)
        h = jnp.dot(w, h, preferred_element_type=jnp.float32) + b
        if l < N_LAYERS - 1:
            h = jnp.where(h >= 0, h, LEAKY_COEF * h)       # leaky_relu(0.15)
    o_ref[...] = h.astype(o_ref.dtype)                     # (1, TB)


def pack_params(params):
    """Pack [(W(out,in), b(out,)), ...] into one (N_LAYERS, 8, 128) f32 slab."""
    packed = jnp.zeros((N_LAYERS, PACK_SUB, PACK_LANE), jnp.float32)
    for l, (w, b) in enumerate(params):
        d_out, d_in = w.shape
        packed = packed.at[l, :d_out, :d_in].set(w.astype(jnp.float32))
        packed = packed.at[l, :d_out, d_in].set(b.astype(jnp.float32))
    return packed


def perceptron_forward(x, params, tile_b=128):
    """x: (dim_input, batch) float32 (PyTorch 'column' convention: _forward
    does x.T internally).  params: list of (W, b) with PyTorch Linear shapes
    W (out, in), b (out,).  Returns (batch, dim_output), matching PyTorch.

    tile_b must be a multiple of 128; for large batches 512-2048 is a good
    sweep range (keep it modest on v5e's 16 MiB scoped-VMEM default)."""
    dim_in, batch = x.shape
    assert dim_in == DIM_INPUT
    assert tile_b % 128 == 0

    packed = pack_params(params)

    padded_b = ((batch + tile_b - 1) // tile_b) * tile_b
    if padded_b != batch:
        x = jnp.pad(x, ((0, 0), (0, padded_b - batch)))

    grid = (padded_b // tile_b,)

    out = pl.pallas_call(
        mlp_kernel,
        out_shape=jax.ShapeDtypeStruct((DIM_OUTPUT, padded_b), jnp.float32),
        grid_spec=pltpu.PrefetchScalarGridSpec(
            num_scalar_prefetch=0,
            grid=grid,
            in_specs=[
                # Packed weights: constant block index -> DMA'd once, stays
                # VMEM-resident across all batch tiles.
                pl.BlockSpec((N_LAYERS, PACK_SUB, PACK_LANE),
                             lambda i: (0, 0, 0)),
                # Activations: batch on the 128-lane axis, tiled over grid.
                pl.BlockSpec((DIM_INPUT, tile_b), lambda i: (0, i)),
            ],
            out_specs=pl.BlockSpec((DIM_OUTPUT, tile_b), lambda i: (0, i)),
        ),
        compiler_params=pltpu.CompilerParams(
            dimension_semantics=("parallel",)),
    )(packed, x)

    out = out[:, :batch]   # drop batch padding -> (1, B)
    return out.T           # (B, 1) to match ModelPerceptron._forward output


def init_params(key):
    """Deterministic init mimicking torch.nn.Linear (uniform +-1/sqrt(fan_in)).
    Weights kept in PyTorch convention: W (out_features, in_features),
    b (out_features,)."""
    params = []
    for d_out, d_in in LAYER_DIMS:
        key, kw, kb = jax.random.split(key, 3)
        bound = 1.0 / (d_in ** 0.5)
        w = jax.random.uniform(kw, (d_out, d_in), jnp.float32,
                               minval=-bound, maxval=bound)
        b = jax.random.uniform(kb, (d_out,), jnp.float32,
                               minval=-bound, maxval=bound)
        params.append((w, b))
    return params


def reference_forward(x, params):
    """Pure-JAX reference of ModelPerceptron._forward for validation."""
    h = x.T                                    # (B, 12)
    for i, (w, b) in enumerate(params):
        h = h @ w.T + b
        if i < len(params) - 1:
            h = jnp.where(h >= 0, h, LEAKY_COEF * h)
    return h                                   # (B, 1)


if __name__ == "__main__":
    key = jax.random.PRNGKey(0)
    key, kx = jax.random.split(key)

    batch = 200   # non-multiple of 128 to exercise the padding path
    # input layout: (dim_input, batch), matching the x.T usage in _forward
    x = jax.random.uniform(kx, (DIM_INPUT, batch), jnp.float32)

    params = init_params(key)

    out = perceptron_forward(x, params)
    out = jax.block_until_ready(out)

    ref = reference_forward(x, params)
    assert out.shape == (batch, DIM_OUTPUT), out.shape
    assert jnp.allclose(out, ref, atol=1e-5, rtol=1e-5), (out, ref)

    print("KERNEL_OK")
</pallas_src>

<mosaic_0001>
module attributes {stable_mosaic.version = 11 : i64} {
  func.func @mlp_kernel(%arg0: i32, %arg1: memref<5x8x128xf32, #tpu.memory_space<vmem>>, %arg2: memref<12x128xf32, #tpu.memory_space<vmem>>, %arg3: memref<1x128xf32, #tpu.memory_space<vmem>>) attributes {dimension_semantics = [#tpu.dimension_semantics<parallel>], iteration_bounds = array<i64: 2>, scalar_prefetch = 0 : i64, scratch_operands = 0 : i64, tpu.core_type = #tpu.core_type<tc>, window_params = [{pipeline_mode = #tpu.pipeline_mode<synchronous>, transform_indices = @transform_0, window_bounds = array<i64: 5, 8, 128>}, {transform_indices = @transform_1, window_bounds = array<i64: 12, 128>}, {transform_indices = @transform_2, window_bounds = array<i64: 1, 128>}]} {
    %c0 = arith.constant 0 : index
    %c0_0 = arith.constant 0 : index
    %0 = vector.load %arg2[%c0, %c0_0] : memref<12x128xf32, #tpu.memory_space<vmem>>, vector<12x128xf32>
    %c0_1 = arith.constant 0 : index
    %c0_2 = arith.constant 0 : index
    %c0_3 = arith.constant 0 : index
    %1 = vector.load %arg1[%c0_1, %c0_2, %c0_3] : memref<5x8x128xf32, #tpu.memory_space<vmem>>, vector<1x8x128xf32>
    %2 = vector.shape_cast %1 : vector<1x8x128xf32> to vector<8x128xf32>
    %3 = vector.extract_strided_slice %2 {offsets = [0, 0], sizes = [4, 12], strides = [1, 1]} : vector<8x128xf32> to vector<4x12xf32>
    %4 = vector.extract_strided_slice %2 {offsets = [0, 12], sizes = [4, 1], strides = [1, 1]} : vector<8x128xf32> to vector<4x1xf32>
    %cst = arith.constant dense<0.000000e+00> : vector<4x128xf32>
    %5 = tpu.matmul %3, %0, %cst {dimension_numbers = #tpu.dot_dimension_numbers<[1], [0], [0], [1], [0, 0, 1, 1], [], []>} : vector<4x12xf32>, vector<12x128xf32>, vector<4x128xf32> -> vector<4x128xf32>
    %6 = vector.broadcast %4 : vector<4x1xf32> to vector<4x128xf32>
    %7 = arith.addf %5, %6 : vector<4x128xf32>
    %cst_4 = arith.constant 0.000000e+00 : f32
    %8 = vector.broadcast %cst_4 : f32 to vector<4x128xf32>
    %9 = arith.cmpf oge, %7, %8 : vector<4x128xf32>
    %cst_5 = arith.constant 1.500000e-01 : f32
    %10 = vector.broadcast %cst_5 : f32 to vector<4x128xf32>
    %11 = arith.mulf %10, %7 : vector<4x128xf32>
    %12 = arith.select %9, %7, %11 : vector<4x128xi1>, vector<4x128xf32>
    %c1 = arith.constant 1 : index
    %c0_6 = arith.constant 0 : index
    %c0_7 = arith.constant 0 : index
    %13 = vector.load %arg1[%c1, %c0_6, %c0_7] : memref<5x8x128xf32, #tpu.memory_space<vmem>>, vector<1x8x128xf32>
    %14 = vector.shape_cast %13 : vector<1x8x128xf32> to vector<8x128xf32>
    %15 = vector.extract_strided_slice %14 {offsets = [0, 0], sizes = [4, 4], strides = [1, 1]} : vector<8x128xf32> to vector<4x4xf32>
    %16 = vector.extract_strided_slice %14 {offsets = [0, 4], sizes = [4, 1], strides = [1, 1]} : vector<8x128xf32> to vector<4x1xf32>
    %cst_8 = arith.constant dense<0.000000e+00> : vector<4x128xf32>
    %17 = tpu.matmul %15, %12, %cst_8 {dimension_numbers = #tpu.dot_dimension_numbers<[1], [0], [0], [1], [0, 0, 1, 1], [], []>} : vector<4x4xf32>, vector<4x128xf32>, vector<4x128xf32> -> vector<4x128xf32>
    %18 = vector.broadcast %16 : vector<4x1xf32> to vector<4x128xf32>
    %19 = arith.addf %17, %18 : vector<4x128xf32>
    %cst_9 = arith.constant 0.000000e+00 : f32
    %20 = vector.broadcast %cst_9 : f32 to vector<4x128xf32>
    %21 = arith.cmpf oge, %19, %20 : vector<4x128xf32>
    %cst_10 = arith.constant 1.500000e-01 : f32
    %22 = vector.broadcast %cst_10 : f32 to vector<4x128xf32>
    %23 = arith.mulf %22, %19 : vector<4x128xf32>
    %24 = arith.select %21, %19, %23 : vector<4x128xi1>, vector<4x128xf32>
    %c2 = arith.constant 2 : index
    %c0_11 = arith.constant 0 : index
    %c0_12 = arith.constant 0 : index
    %25 = vector.load %arg1[%c2, %c0_11, %c0_12] : memref<5x8x128xf32, #tpu.memory_space<vmem>>, vector<1x8x128xf32>
    %26 = vector.shape_cast %25 : vector<1x8x128xf32> to vector<8x128xf32>
    %27 = vector.extract_strided_slice %26 {offsets = [0, 0], sizes = [4, 4], strides = [1, 1]} : vector<8x128xf32> to vector<4x4xf32>
    %28 = vector.extract_strided_slice %26 {offsets = [0, 4], sizes = [4, 1], strides = [1, 1]} : vector<8x128xf32> to vector<4x1xf32>
    %cst_13 = arith.constant dense<0.000000e+00> : vector<4x128xf32>
    %29 = tpu.matmul %27, %24, %cst_13 {dimension_numbers = #tpu.dot_dimension_numbers<[1], [0], [0], [1], [0, 0, 1, 1], [], []>} : vector<4x4xf32>, vector<4x128xf32>, vector<4x128xf32> -> vector<4x128xf32>
    %30 = vector.broadcast %28 : vector<4x1xf32> to vector<4x128xf32>
    %31 = arith.addf %29, %30 : vector<4x128xf32>
    %cst_14 = arith.constant 0.000000e+00 : f32
    %32 = vector.broadcast %cst_14 : f32 to vector<4x128xf32>
    %33 = arith.cmpf oge, %31, %32 : vector<4x128xf32>
    %cst_15 = arith.constant 1.500000e-01 : f32
    %34 = vector.broadcast %cst_15 : f32 to vector<4x128xf32>
    %35 = arith.mulf %34, %31 : vector<4x128xf32>
    %36 = arith.select %33, %31, %35 : vector<4x128xi1>, vector<4x128xf32>
    %c3 = arith.constant 3 : index
    %c0_16 = arith.constant 0 : index
    %c0_17 = arith.constant 0 : index
    %37 = vector.load %arg1[%c3, %c0_16, %c0_17] : memref<5x8x128xf32, #tpu.memory_space<vmem>>, vector<1x8x128xf32>
    %38 = vector.shape_cast %37 : vector<1x8x128xf32> to vector<8x128xf32>
    %39 = vector.extract_strided_slice %38 {offsets = [0, 0], sizes = [4, 4], strides = [1, 1]} : vector<8x128xf32> to vector<4x4xf32>
    %40 = vector.extract_strided_slice %38 {offsets = [0, 4], sizes = [4, 1], strides = [1, 1]} : vector<8x128xf32> to vector<4x1xf32>
    %cst_18 = arith.constant dense<0.000000e+00> : vector<4x128xf32>
    %41 = tpu.matmul %39, %36, %cst_18 {dimension_numbers = #tpu.dot_dimension_numbers<[1], [0], [0], [1], [0, 0, 1, 1], [], []>} : vector<4x4xf32>, vector<4x128xf32>, vector<4x128xf32> -> vector<4x128xf32>
    %42 = vector.broadcast %40 : vector<4x1xf32> to vector<4x128xf32>
    %43 = arith.addf %41, %42 : vector<4x128xf32>
    %cst_19 = arith.constant 0.000000e+00 : f32
    %44 = vector.broadcast %cst_19 : f32 to vector<4x128xf32>
    %45 = arith.cmpf oge, %43, %44 : vector<4x128xf32>
    %cst_20 = arith.constant 1.500000e-01 : f32
    %46 = vector.broadcast %cst_20 : f32 to vector<4x128xf32>
    %47 = arith.mulf %46, %43 : vector<4x128xf32>
    %48 = arith.select %45, %43, %47 : vector<4x128xi1>, vector<4x128xf32>
    %c4 = arith.constant 4 : index
    %c0_21 = arith.constant 0 : index
    %c0_22 = arith.constant 0 : index
    %49 = vector.load %arg1[%c4, %c0_21, %c0_22] : memref<5x8x128xf32, #tpu.memory_space<vmem>>, vector<1x8x128xf32>
    %50 = vector.shape_cast %49 : vector<1x8x128xf32> to vector<8x128xf32>
    %51 = vector.extract_strided_slice %50 {offsets = [0, 0], sizes = [1, 4], strides = [1, 1]} : vector<8x128xf32> to vector<1x4xf32>
    %52 = vector.extract_strided_slice %50 {offsets = [0, 4], sizes = [1, 1], strides = [1, 1]} : vector<8x128xf32> to vector<1x1xf32>
    %cst_23 = arith.constant dense<0.000000e+00> : vector<1x128xf32>
    %53 = tpu.matmul %51, %48, %cst_23 {dimension_numbers = #tpu.dot_dimension_numbers<[1], [0], [0], [1], [0, 0, 1, 1], [], []>} : vector<1x4xf32>, vector<4x128xf32>, vector<1x128xf32> -> vector<1x128xf32>
    %54 = vector.broadcast %52 : vector<1x1xf32> to vector<1x128xf32>
    %55 = arith.addf %53, %54 : vector<1x128xf32>
    %c0_24 = arith.constant 0 : index
    %c0_25 = arith.constant 0 : index
    %56 = vector.load %arg3[%c0_24, %c0_25] : memref<1x128xf32, #tpu.memory_space<vmem>>, vector<1x128xf32>
    tpu.vector_store %arg3[%c0_24, %c0_25], %55 {strides = array<i32>} : memref<1x128xf32, #tpu.memory_space<vmem>>, vector<1x128xf32>,
    return
  }
  func.func @transform_0(%arg0: i32) -> (i32, i32, i32) {
    %c0_i32 = arith.constant 0 : i32
    %c0_i32_0 = arith.constant 0 : i32
    %c0_i32_1 = arith.constant 0 : i32
    %c0_i32_2 = arith.constant 0 : i32
    return %c0_i32, %c0_i32_0, %c0_i32_1 : i32, i32, i32
  }
  func.func @transform_1(%arg0: i32) -> (i32, i32) {
    %c0_i32 = arith.constant 0 : i32
    %c0_i32_0 = arith.constant 0 : i32
    return %c0_i32, %arg0 : i32, i32
  }
  func.func @transform_2(%arg0: i32) -> (i32, i32) {
    %c0_i32 = arith.constant 0 : i32
    %c0_i32_0 = arith.constant 0 : i32
    return %c0_i32, %arg0 : i32, i32
  }
}

</mosaic_0001>

<llo_original>
// kernel: tpu_custom_call.1
$region0: #{tpu_custom_call.1}
  #allocation0 [shape = 'u32[]', space=smem, size = 0x4, offset = 0x4, fixed_abs, tag = 'smem constant byte address 0x4 - core index']
  #allocation1 [shape = 'u32[144,128]{1,0:T(1,128)}', space=vmem, size = 0x12000, scoped, tag = 'internal scratch']
  %s0 = inlined_call_operand.hbm [shape: f32[5,8,128], index: 0, kind: input, shape index: {}]
  %s1 = inlined_call_operand.hbm [shape: f32[12,256], index: 1, kind: input, shape index: {}]
  %s2 = inlined_call_operand.hbm [shape: f32[1,256], index: 2, kind: output, shape index: {}]
  %s3 = sld [smem:[#allocation0]]
  $region49: #{tpu_custom_call.1} parent=0
    _
  %s5 = ssub.s32 1, %s3
  %s6 = scalar_select 0, %s5, %s3
  $region1: #{tpu_custom_call.1} parent=0
    #allocation2 [shape = 'u8[20480]{0}', space=vmem, size = 0x5000, scoped, tag = 'input window, operand 0, single buffered']
    #allocation3 [shape = 's32[2]{0}', space=sflag, size = 0x8, scoped, tag = 'scoped memory for tpu_custom_call.1']
    #allocation4 [shape = 's32[2]{0}', space=sflag, size = 0x8, scoped, tag = 'scoped memory for tpu_custom_call.1']
    #allocation5 [shape = 'u8[16384]{0}', space=vmem, size = 0x4000, scoped, tag = 'input window, operand 1']
    #allocation6 [shape = 's32[2]{0}', space=sflag, size = 0x8, scoped, tag = 'scoped memory for tpu_custom_call.1']
    #allocation7 [shape = 'u8[1024]{0}', space=vmem, size = 0x400, scoped, tag = 'output window, operand 0']
    %7 = vsyncpa [#allocation3], 0
    %8 = vsyncpa [#allocation6], 0
    %s9 = scalar_lea.sflag [#allocation6], 1
    %10 = vsyncpa %s9, 0
    %11 = vsyncpa [#allocation4], 0
    %s12 = scalar_lea.sflag [#allocation4], 1
    %13 = vsyncpa %s12, 0
    loop: start=0, step=1, limit=4
    $region2: #{tpu_custom_call.1} parent=1 // loop_pre_header
      _
    $region3: #{tpu_custom_call.1} parent=1 // loop_header
      %s15 = sphi 0, %s19
      %p16 = scmp.ge.s32.totalorder %s15, 4
      %s23 = sphi 0, %s23
      %s25 = sphi 0, %s23
      %s26 = sphi 0, %s25
      %s40 = sphi 0, %s26
      %s46 = sphi 0, %s48
      %s49 = sphi 0, %s46
      %s50 = sphi 0, %s49
      %s66 = sphi 0, %s50
      %s72 = sphi 0, %s74
      %s75 = sphi 0, %s72
      %s76 = sphi 0, %s75
      %s92 = sphi 0, %s76
    $region4: #{tpu_custom_call.1} parent=1 // loop_header_branch
      %18 = sbr.rel (%p16) target = $region8
    $region5: #{tpu_custom_call.1} parent=1 // loop_body
      %s20 = ssub.s32 %s15, 1
      %s21 = ssub.s32 %s15, 2
      %s22 = sadd.s32 %s15, 1
      %s24 = sadd.s32 %s23, 1
      %p27 = scmp.eq.s32.totalorder %s15, 1
      %p28 = scmp.ne.s32.totalorder %s23, %s25
      %p29 = scmp.eq.s32.totalorder %s15, 0
      %p30 = por %p28, %p29
      %p31 = scmp.ne.s32.totalorder %s23, %s25
      %p32 = scmp.eq.s32.totalorder %s20, 1
      %p33 = por %p31, %p32
      %p34 = scmp.ne.s32.totalorder %s25, %s26
      %p35 = scmp.eq.s32.totalorder %s20, 0
      %p36 = por %p34, %p35
      %p37 = scmp.ne.s32.totalorder %s25, %s26
      %p38 = scmp.eq.s32.totalorder %s21, 1
      %p39 = por %p37, %p38
      %p41 = scmp.ne.s32.totalorder %s26, %s40
      %p42 = scmp.eq.s32.totalorder %s21, 0
      %p43 = por %p41, %p42
      %s44 = ssub.s32 %s15, %s22
      %p45 = scmp.eq.s32.totalorder %s44, 0
      %s47 = sadd.s32 %s46, 1
      %s48 = scalar_select %p45, %s46, %s47
      %p51 = pneg %p45
      %p52 = scmp.eq.s32.totalorder %s15, 1
      %p53 = por %p51, %p52
      %p54 = scmp.ne.s32.totalorder %s46, %s49
      %p55 = scmp.eq.s32.totalorder %s15, 0
      %p56 = por %p54, %p55
      %p57 = scmp.ne.s32.totalorder %s46, %s49
      %p58 = scmp.eq.s32.totalorder %s20, 1
      %p59 = por %p57, %p58
      %p60 = scmp.ne.s32.totalorder %s49, %s50
      %p61 = scmp.eq.s32.totalorder %s20, 0
      %p62 = por %p60, %p61
      %p63 = scmp.ne.s32.totalorder %s49, %s50
      %p64 = scmp.eq.s32.totalorder %s21, 1
      %p65 = por %p63, %p64
      %p67 = scmp.ne.s32.totalorder %s50, %s66
      %p68 = scmp.eq.s32.totalorder %s21, 0
      %p69 = por %p67, %p68
      %s70 = ssub.s32 %s15, %s22
      %p71 = scmp.eq.s32.totalorder %s70, 0
      %s73 = sadd.s32 %s72, 1
      %s74 = scalar_select %p71, %s72, %s73
      %p77 = pneg %p71
      %p78 = scmp.eq.s32.totalorder %s15, 1
      %p79 = por %p77, %p78
      %p80 = scmp.ne.s32.totalorder %s72, %s75
      %p81 = scmp.eq.s32.totalorder %s15, 0
      %p82 = por %p80, %p81
      %p83 = scmp.ne.s32.totalorder %s72, %s75
      %p84 = scmp.eq.s32.totalorder %s20, 1
      %p85 = por %p83, %p84
      %p86 = scmp.ne.s32.totalorder %s75, %s76
      %p87 = scmp.eq.s32.totalorder %s20, 0
      %p88 = por %p86, %p87
      %p89 = scmp.ne.s32.totalorder %s75, %s76
      %p90 = scmp.eq.s32.totalorder %s21, 1
      %p91 = por %p89, %p90
      %p93 = scmp.ne.s32.totalorder %s76, %s92
      %p94 = scmp.eq.s32.totalorder %s21, 0
      %p95 = por %p93, %p94
      %p96 = scmp.le.s32.totalorder 1, %s15
      %p97 = scmp.lt.s32.totalorder %s15, 3
      %p98 = pnand %p96, %p97
      %p99 = pneg %p98
      // Predicated region
      $region9: #{tpu_custom_call.1} parent=5 // pred_check
        _
      $region10: #{tpu_custom_call.1} parent=5 // pred_check_branch
        %101 = sbr.rel (%p98) target = $region12
      $region11: #{tpu_custom_call.1} parent=5 // pred_region
        %s102 = ssub.s32 %s15, 1
        // Predicated region
        $region13: #{tpu_custom_call.1} parent=11 // pred_check
          %p103 = pneg %p36
        $region14: #{tpu_custom_call.1} parent=11 // pred_check_branch
          %105 = sbr.rel (%p103) target = $region16
        $region15: #{tpu_custom_call.1} parent=11 // pred_region
          %s107 = ssub.s32 640, 640
          %108 = vsyncadd [#allocation3], %s107
          %s109 = sshll.u32 [#allocation2], 4
          %s110 = int_to_ptr.vmem [resolvable:$true] %s109
          %115 = dma.hbm_to_vmem [thread:$0]  %s0, 640, %s110, [#allocation3], 128, 128, 8
        $region16: #{tpu_custom_call.1} parent=11 // pred_fallthru
          _
      $region12: #{tpu_custom_call.1} parent=5 // pred_fallthru
        _
      %p116 = scmp.lt.s32.totalorder %s15, 2
      // Predicated region
      $region17: #{tpu_custom_call.1} parent=5 // pred_check
        %p117 = pneg %p116
      $region18: #{tpu_custom_call.1} parent=5 // pred_check_branch
        %119 = sbr.rel (%p117) target = $region20
      $region19: #{tpu_custom_call.1} parent=5 // pred_region
        // Predicated region
        $region21: #{tpu_custom_call.1} parent=19 // pred_check
          %p120 = pneg %p56
        $region22: #{tpu_custom_call.1} parent=19 // pred_check_branch
          %122 = sbr.rel (%p120) target = $region24
        $region23: #{tpu_custom_call.1} parent=19 // pred_region
          %s123 = sand.u32 %s46, 1
          %s124 = scalar_lea.sflag [#allocation6], %s123
          %s125 = sand.u32 %s46, 1
          %s126 = smul.addr %s125, 16
          %s127 = scalar_lea.vmem [#allocation5], %s126
          %s129 = ssub.s32 256, 256
          %130 = vsyncadd %s124, %s129
          %s131 = smul.addr %s15, 128
          %s132 = scalar_lea.hbm %s1, %s131
          %s133 = sshll.u32 %s127, 4
          %s134 = int_to_ptr.vmem [resolvable:$true] %s133
          %139 = dma.hbm_to_vmem [thread:$0]  %s132, 256, %s134, %s124, 256, 128, 8
        $region24: #{tpu_custom_call.1} parent=19 // pred_fallthru
          _
      $region20: #{tpu_custom_call.1} parent=5 // pred_fallthru
        _
      %p140 = scmp.le.s32.totalorder 1, %s15
      %p141 = scmp.lt.s32.totalorder %s15, 3
      %p142 = pnand %p140, %p141
      %p143 = pneg %p142
      // Predicated region
      $region25: #{tpu_custom_call.1} parent=5 // pred_check
        _
      $region26: #{tpu_custom_call.1} parent=5 // pred_check_branch
        %145 = sbr.rel (%p142) target = $region28
      $region27: #{tpu_custom_call.1} parent=5 // pred_region
        %s146 = ssub.s32 %s15, 1
        // Predicated region
        $region29: #{tpu_custom_call.1} parent=27 // pred_check
          %p147 = pneg %p36
        $region30: #{tpu_custom_call.1} parent=27 // pred_check_branch
          %149 = sbr.rel (%p147) target = $region32
        $region31: #{tpu_custom_call.1} parent=27 // pred_region
          %150 = dma.done [#allocation3], 640
        $region32: #{tpu_custom_call.1} parent=27 // pred_fallthru
          _
        %s151 = sand.u32 %s49, 1
        %s152 = scalar_lea.sflag [#allocation6], %s151
        %s153 = sand.u32 %s49, 1
        %s154 = smul.addr %s153, 16
        %s155 = scalar_lea.vmem [#allocation5], %s154
        // Predicated region
        $region33: #{tpu_custom_call.1} parent=27 // pred_check
          %p156 = pneg %p62
        $region34: #{tpu_custom_call.1} parent=27 // pred_check_branch
          %158 = sbr.rel (%p156) target = $region36
        $region35: #{tpu_custom_call.1} parent=27 // pred_region
          %159 = dma.done %s152, 256
        $region36: #{tpu_custom_call.1} parent=27 // pred_fallthru
          _
        %p160 = pneg %p36
        %p161 = pneg %p33
        %s162 = sand.u32 %s49, 1
        %s163 = scalar_lea.sflag [#allocation6], %s162
        %s164 = sand.u32 %s49, 1
        %s165 = smul.addr %s164, 16
        %s166 = scalar_lea.vmem [#allocation5], %s165
        %p167 = pneg %p62
        %p168 = pneg %p59
        %p169 = pneg %p88
        %p170 = pneg %p85
        %s171 = sand.u32 %s75, 1
        %s172 = scalar_lea.sflag [#allocation4], %s171
        %s173 = sand.u32 %s75, 1
        %s174 = scalar_lea.vmem [#allocation7], %s173
        %v175 = vld [vmem:[%s155] sm:$0xff]
        %v176 = vld [vmem:[%s155 + $0x8] sm:$0xf]
        %v177 = vld [vmem:[#allocation2] sm:$0xff]
        %179 = vset.pattern.permute.xlu0 12
        %180 = vperm.xlu0 %179, %v177
        %v181 = vpop.permute.xlu0 %180
        %vm183 = vcmask 97280
        %v184 = vsel %vm183, %v177, 0
        %vm186 = vcmask 1043456
        %v188 = vsel %vm186, %v176, 0
        %190 = vmatprep.subr.mxu0 0.0
        %191 = vmatpush1.msra.mxu0 %v175
        %192 = vmatprep.subr.mxu0 0.0
        %193 = vmatpush1.msra.mxu0 %v188
        %194 = vmatprep.subr.mxu0 0.0
        %195 = vmatpush1.msra.mxu0 0.0
        %196 = vmatprep.subr.mxu0 0.0
        %197 = vmatpush1.msra.mxu0 0.0
        %198 = vmatprep.subr.mxu0 0.0
        %199 = vmatpush1.msra.mxu0 0.0
        %200 = vmatprep.subr.mxu0 0.0
        %201 = vmatpush1.msra.mxu0 0.0
        %202 = vmatprep.subr.mxu0 0.0
        %203 = vmatpush1.msra.mxu0 0.0
        %204 = vmatprep.subr.mxu0 0.0
        %205 = vmatpush1.msra.mxu0 0.0
        %206 = vmatprep.subr.mxu0 0.0
        %207 = vmatpush1.msra.mxu0 0.0
        %208 = vmatprep.subr.mxu0 0.0
        %209 = vmatpush1.msra.mxu0 0.0
        %210 = vmatprep.subr.mxu0 0.0
        %211 = vmatpush1.msra.mxu0 0.0
        %212 = vmatprep.subr.mxu0 0.0
        %213 = vmatpush1.msra.mxu0 0.0
        %214 = vmatprep.subr.mxu0 0.0
        %215 = vmatpush1.msra.mxu0 0.0
        %216 = vmatprep.subr.mxu0 0.0
        %217 = vmatpush1.msra.mxu0 0.0
        %218 = vmatprep.subr.mxu0 0.0
        %219 = vmatpush1.msra.mxu0 0.0
        %220 = vmatprep.subr.mxu0 0.0
        %221 = vmatpush1.msra.mxu0 0.0
        %222 = vmatprep.subr.mxu0 0.0
        %223 = vmatpush1.msra.mxu0 0.0
        %224 = vmatprep.subr.mxu0 0.0
        %225 = vmatpush1.msra.mxu0 0.0
        %226 = vmatprep.subr.mxu0 0.0
        %227 = vmatpush1.msra.mxu0 0.0
        %228 = vmatprep.subr.mxu0 0.0
        %229 = vmatpush1.msra.mxu0 0.0
        %230 = vmatprep.subr.mxu0 0.0
        %231 = vmatpush1.msra.mxu0 0.0
        %232 = vmatprep.subr.mxu0 0.0
        %233 = vmatpush1.msra.mxu0 0.0
        %234 = vmatprep.subr.mxu0 0.0
        %235 = vmatpush1.msra.mxu0 0.0
        %236 = vmatprep.subr.mxu0 0.0
        %237 = vmatpush1.msra.mxu0 0.0
        %238 = vmatprep.subr.mxu0 0.0
        %239 = vmatpush1.msra.mxu0 0.0
        %240 = vmatprep.subr.mxu0 0.0
        %241 = vmatpush1.msra.mxu0 0.0
        %242 = vmatprep.subr.mxu0 0.0
        %243 = vmatpush1.msra.mxu0 0.0
        %244 = vmatprep.subr.mxu0 0.0
        %245 = vmatpush1.msra.mxu0 0.0
        %246 = vmatprep.subr.mxu0 0.0
        %247 = vmatpush1.msra.mxu0 0.0
        %248 = vmatprep.subr.mxu0 0.0
        %249 = vmatpush1.msra.mxu0 0.0
        %250 = vmatprep.subr.mxu0 0.0
        %251 = vmatpush1.msra.mxu0 0.0
        %252 = vmatprep.subr.mxu0 0.0
        %253 = vmatpush1.msra.mxu0 0.0
        %254 = vmatprep.mubr.f32.mxu0 0.0
        %255 = vmatmul.mubr.f32.gmra.mrb[0].mxu0 %v184
        %v256 = vpop.f32.mrb[0].mxu0
        %v257 = vadd.f32 %v181, %v256
        %v258 = vpop.f32.mrb[0].mxu0
        %259 = vdwg.mxu0
        %vm260 = vcmp.ge.f32.partialorder %v257, 0.0
        %v261 = vmul.f32 %v257, 0.15
        %v262 = vsel %vm260, %v257, %v261
        %s263 = scalar_lea.vmem [#allocation2], 8
        %v264 = vld [vmem:[%s263] sm:$0xff]
        %266 = vset.pattern.permute.xlu0 4
        %267 = vperm.xlu0 %266, %v264
        %v268 = vpop.permute.xlu0 %267
        %vm270 = vcmask 31744
        %v271 = vsel %vm270, %v264, 0
        %v274 = vsel %vm186, %v262, 0
        %276 = vmatprep.subr.mxu0 0.0
        %277 = vmatpush1.msra.mxu0 %v274
        %278 = vmatprep.subr.mxu0 0.0
        %279 = vmatpush1.msra.mxu0 0.0
        %280 = vmatprep.subr.mxu0 0.0
        %281 = vmatpush1.msra.mxu0 0.0
        %282 = vmatprep.subr.mxu0 0.0
        %283 = vmatpush1.msra.mxu0 0.0
        %284 = vmatprep.subr.mxu0 0.0
        %285 = vmatpush1.msra.mxu0 0.0
        %286 = vmatprep.subr.mxu0 0.0
        %287 = vmatpush1.msra.mxu0 0.0
        %288 = vmatprep.subr.mxu0 0.0
        %289 = vmatpush1.msra.mxu0 0.0
        %290 = vmatprep.subr.mxu0 0.0
        %291 = vmatpush1.msra.mxu0 0.0
        %292 = vmatprep.subr.mxu0 0.0
        %293 = vmatpush1.msra.mxu0 0.0
        %294 = vmatprep.subr.mxu0 0.0
        %295 = vmatpush1.msra.mxu0 0.0
        %296 = vmatprep.subr.mxu0 0.0
        %297 = vmatpush1.msra.mxu0 0.0
        %298 = vmatprep.subr.mxu0 0.0
        %299 = vmatpush1.msra.mxu0 0.0
        %300 = vmatprep.subr.mxu0 0.0
        %301 = vmatpush1.msra.mxu0 0.0
        %302 = vmatprep.subr.mxu0 0.0
        %303 = vmatpush1.msra.mxu0 0.0
        %304 = vmatprep.subr.mxu0 0.0
        %305 = vmatpush1.msra.mxu0 0.0
        %306 = vmatprep.subr.mxu0 0.0
        %307 = vmatpush1.msra.mxu0 0.0
        %308 = vmatprep.subr.mxu0 0.0
        %309 = vmatpush1.msra.mxu0 0.0
        %310 = vmatprep.subr.mxu0 0.0
        %311 = vmatpush1.msra.mxu0 0.0
        %312 = vmatprep.subr.mxu0 0.0
        %313 = vmatpush1.msra.mxu0 0.0
        %314 = vmatprep.subr.mxu0 0.0
        %315 = vmatpush1.msra.mxu0 0.0
        %316 = vmatprep.subr.mxu0 0.0
        %317 = vmatpush1.msra.mxu0 0.0
        %318 = vmatprep.subr.mxu0 0.0
        %319 = vmatpush1.msra.mxu0 0.0
        %320 = vmatprep.subr.mxu0 0.0
        %321 = vmatpush1.msra.mxu0 0.0
        %322 = vmatprep.subr.mxu0 0.0
        %323 = vmatpush1.msra.mxu0 0.0
        %324 = vmatprep.subr.mxu0 0.0
        %325 = vmatpush1.msra.mxu0 0.0
        %326 = vmatprep.subr.mxu0 0.0
        %327 = vmatpush1.msra.mxu0 0.0
        %328 = vmatprep.subr.mxu0 0.0
        %329 = vmatpush1.msra.mxu0 0.0
        %330 = vmatprep.subr.mxu0 0.0
        %331 = vmatpush1.msra.mxu0 0.0
        %332 = vmatprep.subr.mxu0 0.0
        %333 = vmatpush1.msra.mxu0 0.0
        %334 = vmatprep.subr.mxu0 0.0
        %335 = vmatpush1.msra.mxu0 0.0
        %336 = vmatprep.subr.mxu0 0.0
        %337 = vmatpush1.msra.mxu0 0.0
        %338 = vmatprep.subr.mxu0 0.0
        %339 = vmatpush1.msra.mxu0 0.0
        %340 = vmatprep.mubr.f32.mxu0 0.0
        %341 = vmatmul.mubr.f32.gmra.mrb[0].mxu0 %v271
        %v342 = vpop.f32.mrb[0].mxu0
        %v343 = vadd.f32 %v268, %v342
        %v344 = vpop.f32.mrb[0].mxu0
        %345 = vdwg.mxu0
        %vm346 = vcmp.ge.f32.partialorder %v343, 0.0
        %v347 = vmul.f32 %v343, 0.15
        %v348 = vsel %vm346, %v343, %v347
        %s349 = scalar_lea.vmem [#allocation2], 16
        %v350 = vld [vmem:[%s349] sm:$0xff]
        %352 = vset.pattern.permute.xlu0 4
        %353 = vperm.xlu0 %352, %v350
        %v354 = vpop.permute.xlu0 %353
        %v356 = vsel %vm270, %v350, 0
        %v359 = vsel %vm186, %v348, 0
        %361 = vmatprep.subr.mxu0 0.0
        %362 = vmatpush1.msra.mxu0 %v359
        %363 = vmatprep.subr.mxu0 0.0
        %364 = vmatpush1.msra.mxu0 0.0
        %365 = vmatprep.subr.mxu0 0.0
        %366 = vmatpush1.msra.mxu0 0.0
        %367 = vmatprep.subr.mxu0 0.0
        %368 = vmatpush1.msra.mxu0 0.0
        %369 = vmatprep.subr.mxu0 0.0
        %370 = vmatpush1.msra.mxu0 0.0
        %371 = vmatprep.subr.mxu0 0.0
        %372 = vmatpush1.msra.mxu0 0.0
        %373 = vmatprep.subr.mxu0 0.0
        %374 = vmatpush1.msra.mxu0 0.0
        %375 = vmatprep.subr.mxu0 0.0
        %376 = vmatpush1.msra.mxu0 0.0
        %377 = vmatprep.subr.mxu0 0.0
        %378 = vmatpush1.msra.mxu0 0.0
        %379 = vmatprep.subr.mxu0 0.0
        %380 = vmatpush1.msra.mxu0 0.0
        %381 = vmatprep.subr.mxu0 0.0
        %382 = vmatpush1.msra.mxu0 0.0
        %383 = vmatprep.subr.mxu0 0.0
        %384 = vmatpush1.msra.mxu0 0.0
        %385 = vmatprep.subr.mxu0 0.0
        %386 = vmatpush1.msra.mxu0 0.0
        %387 = vmatprep.subr.mxu0 0.0
        %388 = vmatpush1.msra.mxu0 0.0
        %389 = vmatprep.subr.mxu0 0.0
        %390 = vmatpush1.msra.mxu0 0.0
        %391 = vmatprep.subr.mxu0 0.0
        %392 = vmatpush1.msra.mxu0 0.0
        %393 = vmatprep.subr.mxu0 0.0
        %394 = vmatpush1.msra.mxu0 0.0
        %395 = vmatprep.subr.mxu0 0.0
        %396 = vmatpush1.msra.mxu0 0.0
        %397 = vmatprep.subr.mxu0 0.0
        %398 = vmatpush1.msra.mxu0 0.0
        %399 = vmatprep.subr.mxu0 0.0
        %400 = vmatpush1.msra.mxu0 0.0
        %401 = vmatprep.subr.mxu0 0.0
        %402 = vmatpush1.msra.mxu0 0.0
        %403 = vmatprep.subr.mxu0 0.0
        %404 = vmatpush1.msra.mxu0 0.0
        %405 = vmatprep.subr.mxu0 0.0
        %406 = vmatpush1.msra.mxu0 0.0
        %407 = vmatprep.subr.mxu0 0.0
        %408 = vmatpush1.msra.mxu0 0.0
        %409 = vmatprep.subr.mxu0 0.0
        %410 = vmatpush1.msra.mxu0 0.0
        %411 = vmatprep.subr.mxu0 0.0
        %412 = vmatpush1.msra.mxu0 0.0
        %413 = vmatprep.subr.mxu0 0.0
        %414 = vmatpush1.msra.mxu0 0.0
        %415 = vmatprep.subr.mxu0 0.0
        %416 = vmatpush1.msra.mxu0 0.0
        %417 = vmatprep.subr.mxu0 0.0
        %418 = vmatpush1.msra.mxu0 0.0
        %419 = vmatprep.subr.mxu0 0.0
        %420 = vmatpush1.msra.mxu0 0.0
        %421 = vmatprep.subr.mxu0 0.0
        %422 = vmatpush1.msra.mxu0 0.0
        %423 = vmatprep.subr.mxu0 0.0
        %424 = vmatpush1.msra.mxu0 0.0
        %425 = vmatprep.mubr.f32.mxu0 0.0
        %426 = vmatmul.mubr.f32.gmra.mrb[0].mxu0 %v356
        %v427 = vpop.f32.mrb[0].mxu0
        %v428 = vadd.f32 %v354, %v427
        %v429 = vpop.f32.mrb[0].mxu0
        %430 = vdwg.mxu0
        %vm431 = vcmp.ge.f32.partialorder %v428, 0.0
        %v432 = vmul.f32 %v428, 0.15
        %v433 = vsel %vm431, %v428, %v432
        %s434 = scalar_lea.vmem [#allocation2], 24
        %v435 = vld [vmem:[%s434] sm:$0xff]
        %437 = vset.pattern.permute.xlu0 4
        %438 = vperm.xlu0 %437, %v435
        %v439 = vpop.permute.xlu0 %438
        %v441 = vsel %vm270, %v435, 0
        %v444 = vsel %vm186, %v433, 0
        %446 = vmatprep.subr.mxu0 0.0
        %447 = vmatpush1.msra.mxu0 %v444
        %448 = vmatprep.subr.mxu0 0.0
        %449 = vmatpush1.msra.mxu0 0.0
        %450 = vmatprep.subr.mxu0 0.0
        %451 = vmatpush1.msra.mxu0 0.0
        %452 = vmatprep.subr.mxu0 0.0
        %453 = vmatpush1.msra.mxu0 0.0
        %454 = vmatprep.subr.mxu0 0.0
        %455 = vmatpush1.msra.mxu0 0.0
        %456 = vmatprep.subr.mxu0 0.0
        %457 = vmatpush1.msra.mxu0 0.0
        %458 = vmatprep.subr.mxu0 0.0
        %459 = vmatpush1.msra.mxu0 0.0
        %460 = vmatprep.subr.mxu0 0.0
        %461 = vmatpush1.msra.mxu0 0.0
        %462 = vmatprep.subr.mxu0 0.0
        %463 = vmatpush1.msra.mxu0 0.0
        %464 = vmatprep.subr.mxu0 0.0
        %465 = vmatpush1.msra.mxu0 0.0
        %466 = vmatprep.subr.mxu0 0.0
        %467 = vmatpush1.msra.mxu0 0.0
        %468 = vmatprep.subr.mxu0 0.0
        %469 = vmatpush1.msra.mxu0 0.0
        %470 = vmatprep.subr.mxu0 0.0
        %471 = vmatpush1.msra.mxu0 0.0
        %472 = vmatprep.subr.mxu0 0.0
        %473 = vmatpush1.msra.mxu0 0.0
        %474 = vmatprep.subr.mxu0 0.0
        %475 = vmatpush1.msra.mxu0 0.0
        %476 = vmatprep.subr.mxu0 0.0
        %477 = vmatpush1.msra.mxu0 0.0
        %478 = vmatprep.subr.mxu0 0.0
        %479 = vmatpush1.msra.mxu0 0.0
        %480 = vmatprep.subr.mxu0 0.0
        %481 = vmatpush1.msra.mxu0 0.0
        %482 = vmatprep.subr.mxu0 0.0
        %483 = vmatpush1.msra.mxu0 0.0
        %484 = vmatprep.subr.mxu0 0.0
        %485 = vmatpush1.msra.mxu0 0.0
        %486 = vmatprep.subr.mxu0 0.0
        %487 = vmatpush1.msra.mxu0 0.0
        %488 = vmatprep.subr.mxu0 0.0
        %489 = vmatpush1.msra.mxu0 0.0
        %490 = vmatprep.subr.mxu0 0.0
        %491 = vmatpush1.msra.mxu0 0.0
        %492 = vmatprep.subr.mxu0 0.0
        %493 = vmatpush1.msra.mxu0 0.0
        %494 = vmatprep.subr.mxu0 0.0
        %495 = vmatpush1.msra.mxu0 0.0
        %496 = vmatprep.subr.mxu0 0.0
        %497 = vmatpush1.msra.mxu0 0.0
        %498 = vmatprep.subr.mxu0 0.0
        %499 = vmatpush1.msra.mxu0 0.0
        %500 = vmatprep.subr.mxu0 0.0
        %501 = vmatpush1.msra.mxu0 0.0
        %502 = vmatprep.subr.mxu0 0.0
        %503 = vmatpush1.msra.mxu0 0.0
        %504 = vmatprep.subr.mxu0 0.0
        %505 = vmatpush1.msra.mxu0 0.0
        %506 = vmatprep.subr.mxu0 0.0
        %507 = vmatpush1.msra.mxu0 0.0
        %508 = vmatprep.subr.mxu0 0.0
        %509 = vmatpush1.msra.mxu0 0.0
        %510 = vmatprep.mubr.f32.mxu0 0.0
        %511 = vmatmul.mubr.f32.gmra.mrb[0].mxu0 %v441
        %v512 = vpop.f32.mrb[0].mxu0
        %v513 = vadd.f32 %v439, %v512
        %v514 = vpop.f32.mrb[0].mxu0
        %515 = vdwg.mxu0
        %vm516 = vcmp.ge.f32.partialorder %v513, 0.0
        %v517 = vmul.f32 %v513, 0.15
        %v518 = vsel %vm516, %v513, %v517
        %s519 = scalar_lea.vmem [#allocation2], 32
        %v520 = vld [vmem:[%s519] sm:$0xff]
        %522 = vset.pattern.permute.xlu0 4
        %523 = vperm.xlu0 %522, %v520
        %v524 = vpop.permute.xlu0 %523
        %v526 = vsel %vm270, %v520, 0
        %v529 = vsel %vm186, %v518, 0
        %531 = vmatprep.subr.mxu0 0.0
        %532 = vmatpush1.msra.mxu0 %v529
        %533 = vmatprep.subr.mxu0 0.0
        %534 = vmatpush1.msra.mxu0 0.0
        %535 = vmatprep.subr.mxu0 0.0
        %536 = vmatpush1.msra.mxu0 0.0
        %537 = vmatprep.subr.mxu0 0.0
        %538 = vmatpush1.msra.mxu0 0.0
        %539 = vmatprep.subr.mxu0 0.0
        %540 = vmatpush1.msra.mxu0 0.0
        %541 = vmatprep.subr.mxu0 0.0
        %542 = vmatpush1.msra.mxu0 0.0
        %543 = vmatprep.subr.mxu0 0.0
        %544 = vmatpush1.msra.mxu0 0.0
        %545 = vmatprep.subr.mxu0 0.0
        %546 = vmatpush1.msra.mxu0 0.0
        %547 = vmatprep.subr.mxu0 0.0
        %548 = vmatpush1.msra.mxu0 0.0
        %549 = vmatprep.subr.mxu0 0.0
        %550 = vmatpush1.msra.mxu0 0.0
        %551 = vmatprep.subr.mxu0 0.0
        %552 = vmatpush1.msra.mxu0 0.0
        %553 = vmatprep.subr.mxu0 0.0
        %554 = vmatpush1.msra.mxu0 0.0
        %555 = vmatprep.subr.mxu0 0.0
        %556 = vmatpush1.msra.mxu0 0.0
        %557 = vmatprep.subr.mxu0 0.0
        %558 = vmatpush1.msra.mxu0 0.0
        %559 = vmatprep.subr.mxu0 0.0
        %560 = vmatpush1.msra.mxu0 0.0
        %561 = vmatprep.subr.mxu0 0.0
        %562 = vmatpush1.msra.mxu0 0.0
        %563 = vmatprep.subr.mxu0 0.0
        %564 = vmatpush1.msra.mxu0 0.0
        %565 = vmatprep.subr.mxu0 0.0
        %566 = vmatpush1.msra.mxu0 0.0
        %567 = vmatprep.subr.mxu0 0.0
        %568 = vmatpush1.msra.mxu0 0.0
        %569 = vmatprep.subr.mxu0 0.0
        %570 = vmatpush1.msra.mxu0 0.0
        %571 = vmatprep.subr.mxu0 0.0
        %572 = vmatpush1.msra.mxu0 0.0
        %573 = vmatprep.subr.mxu0 0.0
        %574 = vmatpush1.msra.mxu0 0.0
        %575 = vmatprep.subr.mxu0 0.0
        %576 = vmatpush1.msra.mxu0 0.0
        %577 = vmatprep.subr.mxu0 0.0
        %578 = vmatpush1.msra.mxu0 0.0
        %579 = vmatprep.subr.mxu0 0.0
        %580 = vmatpush1.msra.mxu0 0.0
        %581 = vmatprep.subr.mxu0 0.0
        %582 = vmatpush1.msra.mxu0 0.0
        %583 = vmatprep.subr.mxu0 0.0
        %584 = vmatpush1.msra.mxu0 0.0
        %585 = vmatprep.subr.mxu0 0.0
        %586 = vmatpush1.msra.mxu0 0.0
        %587 = vmatprep.subr.mxu0 0.0
        %588 = vmatpush1.msra.mxu0 0.0
        %589 = vmatprep.subr.mxu0 0.0
        %590 = vmatpush1.msra.mxu0 0.0
        %591 = vmatprep.subr.mxu0 0.0
        %592 = vmatpush1.msra.mxu0 0.0
        %593 = vmatprep.subr.mxu0 0.0
        %594 = vmatpush1.msra.mxu0 0.0
        %595 = vmatprep.mubr.f32.mxu0 0.0
        %596 = vmatmul.mubr.f32.gmra.mrb[0].mxu0 %v526
        %v597 = vpop.f32.mrb[0].mxu0
        %v598 = vadd.f32 %v524, %v597
        %v599 = vpop.f32.mrb[0].mxu0
        %600 = vdwg.mxu0
        %601 = vst [vmem:[%s174] sm:$0x1] %v598
        %s602 = sand.u32 %s75, 1
        %s603 = scalar_lea.sflag [#allocation4], %s602
        %s604 = sand.u32 %s75, 1
        %s605 = scalar_lea.vmem [#allocation7], %s604
        // Predicated region
        $region37: #{tpu_custom_call.1} parent=27 // pred_check
          %p606 = pneg %p85
        $region38: #{tpu_custom_call.1} parent=27 // pred_check_branch
          %608 = sbr.rel (%p606) target = $region40
        $region39: #{tpu_custom_call.1} parent=27 // pred_region
          %s610 = ssub.s32 16, 16
          %611 = vsyncadd %s603, %s610
          %s612 = smul.addr %s20, 16
          %s613 = scalar_lea.hbm %s2, %s612
          %s615 = sshll.u32 %s605, 4
          %s616 = int_to_ptr.vmem [resolvable:$true] %s615
          %618 = dma.vmem_to_hbm [thread:$0]  %s616, 16, %s613, %s603
        $region40: #{tpu_custom_call.1} parent=27 // pred_fallthru
          _
      $region28: #{tpu_custom_call.1} parent=5 // pred_fallthru
        _
      %p619 = scmp.le.s32.totalorder 2, %s15
      // Predicated region
      $region41: #{tpu_custom_call.1} parent=5 // pred_check
        %p620 = pneg %p619
      $region42: #{tpu_custom_call.1} parent=5 // pred_check_branch
        %622 = sbr.rel (%p620) target = $region44
      $region43: #{tpu_custom_call.1} parent=5 // pred_region
        %s623 = ssub.s32 %s15, 2
        // Predicated region
        $region45: #{tpu_custom_call.1} parent=43 // pred_check
          %p624 = pneg %p91
        $region46: #{tpu_custom_call.1} parent=43 // pred_check_branch
          %626 = sbr.rel (%p624) target = $region48
        $region47: #{tpu_custom_call.1} parent=43 // pred_region
          %s627 = sand.u32 %s76, 1
          %s628 = scalar_lea.sflag [#allocation4], %s627
          %s629 = sand.u32 %s76, 1
          %s630 = scalar_lea.vmem [#allocation7], %s629
          %631 = dma.done %s628, 16
        $region48: #{tpu_custom_call.1} parent=43 // pred_fallthru
          _
      $region44: #{tpu_custom_call.1} parent=5 // pred_fallthru
        _
    $region6: #{tpu_custom_call.1} parent=1 // loop_footer
      %s19 = sadd.s32 1, %s15
    $region7: #{tpu_custom_call.1} parent=1 // loop_footer_branch
      %14 = sbr.rel target = $region3
    $region8: #{tpu_custom_call.1} parent=1 // loop_exit
      _
    %632 = vsyncpa [#allocation3], 1
    %s633 = scalar_lea.sflag [#allocation3], 1
    %634 = vsyncpa %s633, 1
    %635 = vsyncpa [#allocation6], 1
    %s636 = scalar_lea.sflag [#allocation6], 1
    %637 = vsyncpa %s636, 1
    %638 = vsyncpa [#allocation4], 1
    %s639 = scalar_lea.sflag [#allocation4], 1
    %640 = vsyncpa %s639, 1

</llo_original>
